<compile_context>
chip_gen: v5e
topology: v5e:2x2
jax: 0.10.0
libtpu: 0.0.40
codegen_flags: <defaults>
</compile_context>

<pallas_src>
import functools

import jax
import jax.numpy as jnp
from jax import lax
from jax.experimental import pallas as pl
from jax.experimental.pallas import tpu as pltpu


_LANE_CHUNK = 512  # (H=32, 512) f32 hidden slice = 16 vregs: fits comfortably.


def _valuenet_kernel(xt_ref, w1_ref, b1_ref, w2_ref, b2_ref, out_ref, *, chunk):
    """One batch tile, computed transposed (batch on the lane axis).

    xt_ref : (S, TB)  x^T tile          (streamed per grid step)
    w1_ref : (H, S)   fc1.weight        (VMEM-resident, constant index_map)
    b1_ref : (H, 1)   fc1.bias          (resident)
    w2_ref : (H, 1)   fc2.weight^T      (resident)
    b2_ref : (1, 1)   fc2.bias          (resident)
    out_ref: (1, TB)  value predictions (lane-dense stores)
    """
    n_chunks = out_ref.shape[1] // chunk

    # Hoist the (tiny) resident operands out of the chunk loop.
    w1 = w1_ref[...]
    b1 = b1_ref[...]
    w2 = w2_ref[...]
    b2 = b2_ref[...]

    def body(c, carry):
        off = pl.multiple_of(c * chunk, 128)
        # fc1: h^T = W1 @ x^T -> (H, chunk) on the MXU, f32 accumulation.
        h = jnp.dot(w1, xt_ref[:, pl.ds(off, chunk)],
                    preferred_element_type=jnp.float32)
        # Bias (lane-broadcast of a column) + ReLU on the VPU, in f32.
        h = jnp.maximum(h + b1, 0.0)
        # fc2 (output width 1): VPU multiply + sublane (XLU) reduce instead of
        # a second, <1%-utilized MXU pass.  Result is lane-dense (1, chunk).
        v = jnp.sum(h * w2, axis=0, keepdims=True) + b2
        out_ref[:, pl.ds(off, chunk)] = v.astype(out_ref.dtype)
        return carry

    if n_chunks == 1:
        body(0, 0)
    else:
        # Rolled loop keeps each chunk's h live-range bounded (no vreg spill).
        lax.fori_loop(0, n_chunks, body, 0)


def _round_up(n, m):
    return ((n + m - 1) // m) * m


@functools.partial(jax.jit, static_argnames=("block_batch", "compute_dtype"))
def value_net_forward(x, w1, b1, w2, b2, *, block_batch=8192,
                      compute_dtype=jnp.bfloat16):
    """ValueNet forward: relu(x @ W1^T + b1) @ W2^T + b2  ->  (B, 1).

    Parameters use PyTorch nn.Linear layouts:
      x : (B, S)   w1 : (H, S)   b1 : (H,)   w2 : (1, H)   b2 : (1,)
    """
    B, S = x.shape
    H = w1.shape[0]

    # ---- batch-tile sizing (all static Python ints) --------------------------
    b_ceil = _round_up(B, 128)                       # lane-aligned cover of B
    tb = min(_round_up(max(int(block_batch), 128), 128), b_ceil)
    # Prefer >= 2 grid steps when the batch can be split: lets
    # dimension_semantics=("parallel",) use both v7x TensorCores.
    if b_ceil >= 2 * 128 and tb >= b_ceil:
        tb = _round_up(pl.cdiv(b_ceil, 2), 128)
    # The in-kernel lane chunk must divide the tile (both multiples of 128).
    chunk = min(_LANE_CHUNK, tb)
    tb = _round_up(tb, chunk)
    n_tiles = pl.cdiv(B, tb)

    # ---- operand prep: cast BEFORE transpose (halves the wrapper HBM pass) --
    xt = x.astype(compute_dtype).T                   # (S, B), no zero-pad
    w1c = w1.astype(compute_dtype)                   # (H, S)
    b1c = b1.reshape(H, 1).astype(jnp.float32)
    w2c = w2.reshape(H, 1).astype(jnp.float32)       # fc2.weight^T
    b2c = b2.reshape(1, 1).astype(jnp.float32)

    x_bytes = jnp.dtype(compute_dtype).itemsize
    cost = pl.CostEstimate(
        flops=2 * B * H * (S + 1),
        transcendentals=0,
        bytes_accessed=B * S * x_bytes + B * 4
        + H * S * x_bytes + 4 * (2 * H + 1),
    )

    out_t = pl.pallas_call(
        functools.partial(_valuenet_kernel, chunk=chunk),
        out_shape=jax.ShapeDtypeStruct((1, B), jnp.float32),
        grid_spec=pltpu.PrefetchScalarGridSpec(
            num_scalar_prefetch=0,
            grid=(n_tiles,),
            in_specs=[
                pl.BlockSpec((S, tb), lambda i: (0, i)),   # x^T tile (streamed)
                pl.BlockSpec((H, S), lambda i: (0, 0)),    # W1      (resident)
                pl.BlockSpec((H, 1), lambda i: (0, 0)),    # b1      (resident)
                pl.BlockSpec((H, 1), lambda i: (0, 0)),    # W2^T    (resident)
                pl.BlockSpec((1, 1), lambda i: (0, 0)),    # b2      (resident)
            ],
            out_specs=pl.BlockSpec((1, tb), lambda i: (0, i)),
        ),
        compiler_params=pltpu.CompilerParams(
            # Independent batch tiles -> megacore sharding on v7x.
            dimension_semantics=("parallel",),
        ),
        cost_estimate=cost,
    )(xt, w1c, b1c, w2c, b2c)

    return out_t.reshape(B, 1)


def init_params(key, state_dim, hidden_dim):
    """PyTorch-layout params with nn.Linear default init U(-1/sqrt(fan_in), +)."""
    k1, k2, k3, k4 = jax.random.split(key, 4)
    bound1 = 1.0 / jnp.sqrt(jnp.float32(state_dim))
    bound2 = 1.0 / jnp.sqrt(jnp.float32(hidden_dim))
    w1 = jax.random.uniform(k1, (hidden_dim, state_dim), jnp.float32, -bound1, bound1)
    b1 = jax.random.uniform(k2, (hidden_dim,), jnp.float32, -bound1, bound1)
    w2 = jax.random.uniform(k3, (1, hidden_dim), jnp.float32, -bound2, bound2)
    b2 = jax.random.uniform(k4, (1,), jnp.float32, -bound2, bound2)
    return w1, b1, w2, b2


def _reference(x, w1, b1, w2, b2):
    return jnp.maximum(x @ w1.T + b1, 0.0) @ w2.T + b2


if __name__ == "__main__":
    key = jax.random.PRNGKey(0)
    k_x, k_x2, k_x3, k_p = jax.random.split(key, 4)

    state_dim, hidden_dim = 4, 32
    w1, b1, w2, b2 = init_params(k_p, state_dim, hidden_dim)

    # --- small batch (single ragged tile), f32 compute ---
    batch = 8
    x = jax.random.normal(k_x, (batch, state_dim), jnp.float32)
    out = jax.block_until_ready(
        value_net_forward(x, w1, b1, w2, b2, compute_dtype=jnp.float32))
    ref = _reference(x, w1, b1, w2, b2)
    assert out.shape == (batch, 1)
    assert jnp.allclose(out, ref, atol=1e-5, rtol=1e-5)

    # --- non-multiple batch, several small tiles (ragged last block), f32 ---
    batch2 = 300
    x2 = jax.random.normal(k_x2, (batch2, state_dim), jnp.float32)
    out2 = jax.block_until_ready(
        value_net_forward(x2, w1, b1, w2, b2, block_batch=128,
                          compute_dtype=jnp.float32))
    ref2 = _reference(x2, w1, b1, w2, b2)
    assert out2.shape == (batch2, 1)
    assert jnp.allclose(out2, ref2, atol=1e-5, rtol=1e-5)

    # --- default config: bf16 inputs, 2 balanced tiles, in-kernel chunking ---
    batch3 = 2000
    x3 = jax.random.normal(k_x3, (batch3, state_dim), jnp.float32)
    out3 = jax.block_until_ready(value_net_forward(x3, w1, b1, w2, b2))
    ref3 = _reference(x3, w1, b1, w2, b2)
    assert out3.shape == (batch3, 1)
    assert jnp.allclose(out3, ref3, atol=5e-2, rtol=5e-2)

    print("KERNEL_OK")
</pallas_src>

<mosaic_0001>
module attributes {stable_mosaic.version = 11 : i64} {
  func.func @_valuenet_kernel(%arg0: i32, %arg1: memref<4x128xf32, #tpu.memory_space<vmem>>, %arg2: memref<32x4xf32, #tpu.memory_space<vmem>>, %arg3: memref<32x1xf32, #tpu.memory_space<vmem>>, %arg4: memref<32x1xf32, #tpu.memory_space<vmem>>, %arg5: memref<1x1xf32, #tpu.memory_space<vmem>>, %arg6: memref<1x128xf32, #tpu.memory_space<vmem>>) attributes {dimension_semantics = [#tpu.dimension_semantics<parallel>], iteration_bounds = array<i64: 1>, scalar_prefetch = 0 : i64, scratch_operands = 0 : i64, tpu.core_type = #tpu.core_type<tc>, window_params = [{transform_indices = @transform_0, window_bounds = array<i64: 4, 128>}, {pipeline_mode = #tpu.pipeline_mode<synchronous>, transform_indices = @transform_1, window_bounds = array<i64: 32, 4>}, {pipeline_mode = #tpu.pipeline_mode<synchronous>, transform_indices = @transform_2, window_bounds = array<i64: 32, 1>}, {pipeline_mode = #tpu.pipeline_mode<synchronous>, transform_indices = @transform_3, window_bounds = array<i64: 32, 1>}, {pipeline_mode = #tpu.pipeline_mode<synchronous>, transform_indices = @transform_4, window_bounds = array<i64: 1, 1>}, {transform_indices = @transform_5, window_bounds = array<i64: 1, 128>}]} {
    %c0 = arith.constant 0 : index
    %c0_0 = arith.constant 0 : index
    %0 = vector.load %arg2[%c0, %c0_0] : memref<32x4xf32, #tpu.memory_space<vmem>>, vector<32x4xf32>
    %c0_1 = arith.constant 0 : index
    %c0_2 = arith.constant 0 : index
    %1 = vector.load %arg3[%c0_1, %c0_2] : memref<32x1xf32, #tpu.memory_space<vmem>>, vector<32x1xf32>
    %c0_3 = arith.constant 0 : index
    %c0_4 = arith.constant 0 : index
    %2 = vector.load %arg4[%c0_3, %c0_4] : memref<32x1xf32, #tpu.memory_space<vmem>>, vector<32x1xf32>
    %c0_5 = arith.constant 0 : index
    %c0_6 = arith.constant 0 : index
    %3 = vector.load %arg5[%c0_5, %c0_6] : memref<1x1xf32, #tpu.memory_space<vmem>>, vector<1x1xf32>
    %c0_i32 = arith.constant 0 : i32
    %4 = tpu.assume_multiple %c0_i32, 128 : i32
    %c0_7 = arith.constant 0 : index
    %5 = arith.index_cast %4 : i32 to index
    %6 = vector.load %arg1[%c0_7, %5] : memref<4x128xf32, #tpu.memory_space<vmem>>, vector<4x128xf32>
    %cst = arith.constant dense<0.000000e+00> : vector<32x128xf32>
    %7 = tpu.matmul %0, %6, %cst {dimension_numbers = #tpu.dot_dimension_numbers<[1], [0], [0], [1], [0, 0, 1, 1], [], []>} : vector<32x4xf32>, vector<4x128xf32>, vector<32x128xf32> -> vector<32x128xf32>
    %8 = vector.broadcast %1 : vector<32x1xf32> to vector<32x128xf32>
    %9 = arith.addf %7, %8 : vector<32x128xf32>
    %cst_8 = arith.constant 0.000000e+00 : f32
    %10 = vector.broadcast %cst_8 : f32 to vector<32x128xf32>
    %11 = arith.maximumf %9, %10 : vector<32x128xf32>
    %12 = vector.broadcast %2 : vector<32x1xf32> to vector<32x128xf32>
    %13 = arith.mulf %11, %12 : vector<32x128xf32>
    %cst_9 = arith.constant dense<0.000000e+00> : vector<128xf32>
    %14 = vector.multi_reduction <add>, %13, %cst_9 [0] : vector<32x128xf32> to vector<128xf32>
    %15 = vector.shape_cast %14 : vector<128xf32> to vector<1x128xf32>
    %16 = vector.broadcast %3 : vector<1x1xf32> to vector<1x128xf32>
    %17 = arith.addf %15, %16 : vector<1x128xf32>
    %c0_10 = arith.constant 0 : index
    %18 = arith.index_cast %4 : i32 to index
    %19 = vector.load %arg6[%c0_10, %18] : memref<1x128xf32, #tpu.memory_space<vmem>>, vector<1x128xf32>
    tpu.vector_store %arg6[%c0_10, %18], %17 {strides = array<i32>} : memref<1x128xf32, #tpu.memory_space<vmem>>, vector<1x128xf32>,
    return
  }
  func.func @transform_0(%arg0: i32) -> (i32, i32) {
    %c0_i32 = arith.constant 0 : i32
    %c0_i32_0 = arith.constant 0 : i32
    return %c0_i32, %arg0 : i32, i32
  }
  func.func @transform_1(%arg0: i32) -> (i32, i32) {
    %c0_i32 = arith.constant 0 : i32
    %c0_i32_0 = arith.constant 0 : i32
    %c0_i32_1 = arith.constant 0 : i32
    return %c0_i32, %c0_i32_0 : i32, i32
  }
  func.func @transform_2(%arg0: i32) -> (i32, i32) {
    %c0_i32 = arith.constant 0 : i32
    %c0_i32_0 = arith.constant 0 : i32
    %c0_i32_1 = arith.constant 0 : i32
    return %c0_i32, %c0_i32_0 : i32, i32
  }
  func.func @transform_3(%arg0: i32) -> (i32, i32) {
    %c0_i32 = arith.constant 0 : i32
    %c0_i32_0 = arith.constant 0 : i32
    %c0_i32_1 = arith.constant 0 : i32
    return %c0_i32, %c0_i32_0 : i32, i32
  }
  func.func @transform_4(%arg0: i32) -> (i32, i32) {
    %c0_i32 = arith.constant 0 : i32
    %c0_i32_0 = arith.constant 0 : i32
    %c0_i32_1 = arith.constant 0 : i32
    return %c0_i32, %c0_i32_0 : i32, i32
  }
  func.func @transform_5(%arg0: i32) -> (i32, i32) {
    %c0_i32 = arith.constant 0 : i32
    %c0_i32_0 = arith.constant 0 : i32
    return %c0_i32, %arg0 : i32, i32
  }
}

</mosaic_0001>

<llo_original>
// kernel: value_net_forward.1
$region0: #{value_net_forward.1}
  #allocation0 [shape = 'u32[]', space=smem, size = 0x4, offset = 0x4, fixed_abs, tag = 'smem constant byte address 0x4 - core index']
  #allocation1 [shape = 'u32[72,128]{1,0:T(1,128)}', space=vmem, size = 0x9000, scoped, tag = 'internal scratch']
  #allocation2 [shape = 'f32[1,1]{1,0:T(1,128)S(1)}', space=vmem, size = 0x200, scoped, tag = 'scoped memory for value_net_forward.1']
  %s0 = inlined_call_operand.vmem [shape: f32[4,8], index: 0, kind: input, shape index: {}]
  %s1 = inlined_call_operand.vmem [shape: f32[32,4], index: 1, kind: input, shape index: {}]
  %s2 = inlined_call_operand.vmem [shape: f32[32,1], index: 2, kind: input, shape index: {}]
  %s3 = inlined_call_operand.vmem [shape: f32[32,1], index: 3, kind: input, shape index: {}]
  %s4 = inlined_call_operand.<no memory space> [shape: f32[1,1], index: 4, kind: input, shape index: {}]
  %s5 = inlined_call_operand.hbm [shape: f32[1,8], index: 5, kind: output, shape index: {}]
  %s6 = sld [smem:[#allocation0]]
  $region30: #{value_net_forward.1} parent=0
    _
  %s8 = ssub.s32 1, %s6
  %s9 = scalar_select 0, %s8, %s6
  %v10 = vstv %s4
  %11 = vst [vmem:[#allocation2] sm:$0x1] %v10
  $region1: #{value_net_forward.1} parent=0
    #allocation3 [shape = 'u8[512]{0}', space=vmem, size = 0x400, scoped, tag = 'output window, operand 0, single buffered']
    #allocation4 [shape = 's32[1]{0}', space=sflag, size = 0x4, scoped, tag = 'scoped memory for value_net_forward.1']
    %12 = vsyncpa [#allocation4], 0
    // Predicated region
    $region2: #{value_net_forward.1} parent=1 // pred_check
      _
    $region3: #{value_net_forward.1} parent=1 // pred_check_branch
      %14 = sbr.rel (0) target = $region5
    $region4: #{value_net_forward.1} parent=1 // pred_region
      _
    $region5: #{value_net_forward.1} parent=1 // pred_fallthru
      _
    // Predicated region
    $region6: #{value_net_forward.1} parent=1 // pred_check
      _
    $region7: #{value_net_forward.1} parent=1 // pred_check_branch
      %16 = sbr.rel (0) target = $region9
    $region8: #{value_net_forward.1} parent=1 // pred_region
      _
    $region9: #{value_net_forward.1} parent=1 // pred_fallthru
      _
    // Predicated region
    $region10: #{value_net_forward.1} parent=1 // pred_check
      _
    $region11: #{value_net_forward.1} parent=1 // pred_check_branch
      %18 = sbr.rel (0) target = $region13
    $region12: #{value_net_forward.1} parent=1 // pred_region
      _
    $region13: #{value_net_forward.1} parent=1 // pred_fallthru
      _
    // Predicated region
    $region14: #{value_net_forward.1} parent=1 // pred_check
      _
    $region15: #{value_net_forward.1} parent=1 // pred_check_branch
      %20 = sbr.rel (0) target = $region17
    $region16: #{value_net_forward.1} parent=1 // pred_region
      _
    $region17: #{value_net_forward.1} parent=1 // pred_fallthru
      _
    // Predicated region
    $region18: #{value_net_forward.1} parent=1 // pred_check
      _
    $region19: #{value_net_forward.1} parent=1 // pred_check_branch
      %22 = sbr.rel (0) target = $region21
    $region20: #{value_net_forward.1} parent=1 // pred_region
      _
    $region21: #{value_net_forward.1} parent=1 // pred_fallthru
      _
    %v23 = vld [vmem:[%s1] sm:$0xff]
    %v24 = vld [vmem:[%s1 + $0x8] sm:$0xff]
    %v25 = vld [vmem:[%s1 + $0x10] sm:$0xff]
    %v26 = vld [vmem:[%s1 + $0x18] sm:$0xff]
    %v27 = vld [vmem:[%s2] sm:$0xff]
    %v28 = vld [vmem:[%s2 + $0x8] sm:$0xff]
    %v29 = vld [vmem:[%s2 + $0x10] sm:$0xff]
    %v30 = vld [vmem:[%s2 + $0x18] sm:$0xff]
    %v31 = vld [vmem:[%s3] sm:$0xff]
    %v32 = vld [vmem:[%s3 + $0x8] sm:$0xff]
    %v33 = vld [vmem:[%s3 + $0x10] sm:$0xff]
    %v34 = vld [vmem:[%s3 + $0x18] sm:$0xff]
    %v35 = vld [vmem:[#allocation2] sm:$0x1]
    %v36 = vld [vmem:[%s0] sm:$0xf]
    %38 = vset.pattern.permute.xlu0 0
    %39 = vperm.xlu0 %38, %v27
    %v40 = vpop.permute.xlu0 %39
    %43 = vset.pattern.permute.xlu0 0
    %44 = vperm.xlu0 %43, %v28
    %v45 = vpop.permute.xlu0 %44
    %48 = vset.pattern.permute.xlu0 0
    %49 = vperm.xlu0 %48, %v29
    %v50 = vpop.permute.xlu0 %49
    %53 = vset.pattern.permute.xlu0 0
    %54 = vperm.xlu0 %53, %v30
    %v55 = vpop.permute.xlu0 %54
    %vm57 = vcmask 31744
    %v59 = vsel %vm57, %v23, 0
    %v62 = vsel %vm57, %v24, 0
    %v65 = vsel %vm57, %v25, 0
    %v68 = vsel %vm57, %v26, 0
    %vm70 = vcmask 1043456
    %v72 = vsel %vm70, %v36, 0
    %74 = vmatpush.msra.mxu0 0.0
    %75 = vmatpush.msra.mxu0 0.0
    %76 = vmatpush.msra.mxu0 0.0
    %77 = vmatpush.msra.mxu0 0.0
    %78 = vmatpush.msra.mxu0 0.0
    %79 = vmatpush.msra.mxu0 0.0
    %80 = vmatpush.msra.mxu0 0.0
    %81 = vmatpush.msra.mxu0 0.0
    %82 = vmatpush.msra.mxu0 0.0
    %83 = vmatpush.msra.mxu0 0.0
    %84 = vmatpush.msra.mxu0 0.0
    %85 = vmatpush.msra.mxu0 0.0
    %86 = vmatpush.msra.mxu0 0.0
    %87 = vmatpush.msra.mxu0 0.0
    %88 = vmatpush.msra.mxu0 0.0
    %89 = vmatpush.msra.mxu0 %v72
    %90 = vmatmul.f32.gmra.mxu0 %v59
    %v91 = vpop.f32.mrf.mxu0
    %v92 = vadd.f32 %v40, %v91
    %93 = vmatmul.f32.gmra.mxu0 %v62
    %v94 = vpop.f32.mrf.mxu0
    %v95 = vadd.f32 %v45, %v94
    %96 = vmatmul.f32.gmra.mxu0 %v65
    %v97 = vpop.f32.mrf.mxu0
    %v98 = vadd.f32 %v50, %v97
    %99 = vmatmul.f32.gmra.mxu0 %v68
    %v100 = vpop.f32.mrf.mxu0
    %v101 = vadd.f32 %v55, %v100
    %102 = vdwg.mxu0
    %v103 = vmax.f32 %v92, 0.0
    %v104 = vmax.f32 %v95, 0.0
    %v105 = vmax.f32 %v98, 0.0
    %v106 = vmax.f32 %v101, 0.0
    %108 = vset.pattern.permute.xlu0 0
    %109 = vperm.xlu0 %108, %v31
    %v110 = vpop.permute.xlu0 %109
    %113 = vset.pattern.permute.xlu0 0
    %114 = vperm.xlu0 %113, %v32
    %v115 = vpop.permute.xlu0 %114
    %118 = vset.pattern.permute.xlu0 0
    %119 = vperm.xlu0 %118, %v33
    %v120 = vpop.permute.xlu0 %119
    %123 = vset.pattern.permute.xlu0 0
    %124 = vperm.xlu0 %123, %v34
    %v125 = vpop.permute.xlu0 %124
    %v127 = vmul.f32 %v103, %v110
    %v128 = vmul.f32 %v104, %v115
    %v129 = vmul.f32 %v105, %v120
    %v130 = vmul.f32 %v106, %v125
    %v131 = vadd.f32 %v127, %v128
    %v132 = vadd.f32 %v131, %v129
    %v133 = vadd.f32 %v132, %v130
    %v134 = vrot.slane %v133, 4
    %v135 = vadd.f32 %v133, %v134
    %v136 = vrot.slane %v135, 2
    %v137 = vadd.f32 %v135, %v136
    %v138 = vrot.slane %v137, 1
    %v139 = vadd.f32 %v137, %v138
    %141 = vset.pattern.permute.xlu0 0
    %142 = vperm.xlu0 %141, %v35
    %v143 = vpop.permute.xlu0 %142
    %v145 = vperm.slane %v143, 0
    %v146 = vadd.f32 %v139, %v145
    %147 = vst [vmem:[#allocation3] sm:$0x1] %v146
    // Predicated region
    $region22: #{value_net_forward.1} parent=1 // pred_check
      _
    $region23: #{value_net_forward.1} parent=1 // pred_check_branch
      %149 = sbr.rel (0) target = $region25
    $region24: #{value_net_forward.1} parent=1 // pred_region
      %151 = vsyncadd [#allocation4], 0
      %s153 = sshll.u32 [#allocation3], 4
      %s154 = int_to_ptr.vmem [resolvable:$true] %s153
      %s155 = sshll.u32 %s5, 4
      %s156 = int_to_ptr.hbm [resolvable:$true] %s155
      %158 = dma.vmem_to_hbm [thread:$0]  %s154, 16, %s156, [#allocation4]
    $region25: #{value_net_forward.1} parent=1 // pred_fallthru
      _
    // Predicated region
    $region26: #{value_net_forward.1} parent=1 // pred_check
      _
    $region27: #{value_net_forward.1} parent=1 // pred_check_branch
      %160 = sbr.rel (0) target = $region29
    $region28: #{value_net_forward.1} parent=1 // pred_region
      %162 = dma.done [#allocation4], 16
    $region29: #{value_net_forward.1} parent=1 // pred_fallthru
      _
    %163 = vsyncpa [#allocation4], 1

</llo_original>
